<compile_context>
chip_gen: v6e
topology: v6e:2x2x1
jax: 0.10.0
libtpu: 0.0.40
codegen_flags: <defaults>
</compile_context>

<pallas_src>
import functools

import jax
import jax.numpy as jnp
from jax.experimental import pallas as pl
from jax.experimental.pallas import tpu as pltpu


def _label_smoothing_kernel(x_ref, t_ref, out_ref, *, confidence, smoothing,
                            num_classes):
    x = x_ref[...].astype(jnp.float32)          # (tn, C) f32 compute
    tgt = t_ref[...]                            # (tn, 1) int32

    # Fused log-softmax reductions (logprobs = x - lse never materialized).
    m = jnp.max(x, axis=-1, keepdims=True)                              # (tn, 1)
    lse = m + jnp.log(jnp.sum(jnp.exp(x - m), axis=-1, keepdims=True))  # (tn, 1)

    # gather(dim=-1, index=target) via a one-hot compare on the raw logits.
    col = jax.lax.broadcasted_iota(jnp.int32, x.shape, 1)
    x_t = jnp.sum(jnp.where(col == tgt, x, 0.0), axis=-1, keepdims=True)

    # confidence*(lse - x_t) + smoothing*(lse - sum(x)/C), with conf+smooth == 1:
    loss = lse - confidence * x_t
    if smoothing != 0.0:                         # static Python constant
        sum_x = jnp.sum(x, axis=-1, keepdims=True)
        loss = loss - (smoothing / num_classes) * sum_x
    out_ref[...] = loss


def label_smoothing_loss(x, target, smoothing=0.0, *, tile_n=1024,
                         vmem_tile_budget_bytes=32 * 1024 * 1024):
    """x: (N, C) float logits, target: (N,) int labels -> scalar mean loss."""
    n, c = x.shape
    confidence = 1.0 - smoothing
    itemsize = jnp.dtype(x.dtype).itemsize

    # --- choose row-tile size -------------------------------------------------
    align = 16                                   # bf16 sublane packing
    tn = max(align, (tile_n // align) * align)
    # keep the double-buffered logits tile under the VMEM budget (all chip gens)
    while tn > align and 2 * tn * c * itemsize > vmem_tile_budget_bytes:
        tn //= 2
    tn = max(align, (tn // align) * align)

    if n <= tn:
        # Single tile covering all rows exactly: block == full array shape, so
        # no alignment constraint and no out-of-bounds reads/writes at all.
        tn = n
    num_tiles = pl.cdiv(n, tn)
    n_pad = num_tiles * tn   # only the freshly-allocated OUTPUT is padded;
                             # inputs are never copied/padded (ragged last
                             # block reads unspecified values that we drop).

    t2d = target.astype(jnp.int32).reshape(n, 1)

    kernel = functools.partial(
        _label_smoothing_kernel,
        confidence=float(confidence),
        smoothing=float(smoothing),
        num_classes=float(c),
    )

    # Double-buffered logits + targets + per-row-loss output, plus headroom.
    working_set = 2 * tn * c * itemsize + 2 * tn * 4 + 2 * tn * 4
    vmem_limit = int(min(working_set + (4 << 20), 64 << 20))

    row_losses = pl.pallas_call(
        kernel,
        out_shape=jax.ShapeDtypeStruct((n_pad, 1), jnp.float32),
        grid_spec=pltpu.PrefetchScalarGridSpec(
            num_scalar_prefetch=0,
            grid=(num_tiles,),
            in_specs=[
                pl.BlockSpec((tn, c), lambda i: (i, 0)),   # logits tile
                pl.BlockSpec((tn, 1), lambda i: (i, 0)),   # target tile
            ],
            out_specs=pl.BlockSpec((tn, 1), lambda i: (i, 0)),  # per-row losses
        ),
        compiler_params=pltpu.CompilerParams(
            dimension_semantics=("parallel",),   # no carried state -> megacore OK
            vmem_limit_bytes=vmem_limit,
        ),
    )(x, t2d)

    # Mean over the real (unpadded) rows; XLA fuses the slice into the reduce.
    return jnp.sum(row_losses[:n, 0]) / jnp.float32(n)


if __name__ == "__main__":
    key = jax.random.PRNGKey(0)
    kx, kt = jax.random.split(key)

    # Check 1: f32 logits, N a multiple of the tile alignment.
    smoothing = 0.1
    N, C = 16, 32
    x = jax.random.normal(kx, (N, C), dtype=jnp.float32)
    target = jax.random.randint(kt, (N,), 0, C, dtype=jnp.int32)

    loss = jax.block_until_ready(label_smoothing_loss(x, target, smoothing=smoothing))

    logprobs = jax.nn.log_softmax(x, axis=-1)
    nll = -jnp.take_along_axis(logprobs, target[:, None], axis=-1)[:, 0]
    smooth = -jnp.mean(logprobs, axis=-1)
    ref = jnp.mean((1.0 - smoothing) * nll + smoothing * smooth)
    assert jnp.allclose(loss, ref, rtol=1e-5, atol=1e-5), (loss, ref)

    # Check 2: ragged N (no input padding, block == full array) + bf16 logits.
    N2, C2 = 13, 20
    x2 = jax.random.normal(kx, (N2, C2), dtype=jnp.float32).astype(jnp.bfloat16)
    target2 = jax.random.randint(kt, (N2,), 0, C2, dtype=jnp.int32)
    loss2 = jax.block_until_ready(label_smoothing_loss(x2, target2, smoothing=0.2))

    x2f = x2.astype(jnp.float32)                 # kernel computes on bf16->f32 values
    logprobs2 = jax.nn.log_softmax(x2f, axis=-1)
    nll2 = -jnp.take_along_axis(logprobs2, target2[:, None], axis=-1)[:, 0]
    smooth2 = -jnp.mean(logprobs2, axis=-1)
    ref2 = jnp.mean(0.8 * nll2 + 0.2 * smooth2)
    assert jnp.allclose(loss2, ref2, rtol=1e-4, atol=1e-4), (loss2, ref2)

    print("KERNEL_OK")
</pallas_src>

<mosaic_0001>
module attributes {stable_mosaic.version = 11 : i64} {
  func.func @_label_smoothing_kernel(%arg0: i32, %arg1: memref<16x32xf32, #tpu.memory_space<vmem>>, %arg2: memref<16x1xi32, #tpu.memory_space<vmem>>, %arg3: memref<16x1xf32, #tpu.memory_space<vmem>>) attributes {dimension_semantics = [#tpu.dimension_semantics<parallel>], iteration_bounds = array<i64: 1>, scalar_prefetch = 0 : i64, scratch_operands = 0 : i64, tpu.core_type = #tpu.core_type<tc>, window_params = [{transform_indices = @transform_0, window_bounds = array<i64: 16, 32>}, {transform_indices = @transform_1, window_bounds = array<i64: 16, 1>}, {transform_indices = @transform_2, window_bounds = array<i64: 16, 1>}]} {
    %c0 = arith.constant 0 : index
    %c0_0 = arith.constant 0 : index
    %0 = vector.load %arg1[%c0, %c0_0] : memref<16x32xf32, #tpu.memory_space<vmem>>, vector<16x32xf32>
    %c0_1 = arith.constant 0 : index
    %c0_2 = arith.constant 0 : index
    %1 = vector.load %arg2[%c0_1, %c0_2] : memref<16x1xi32, #tpu.memory_space<vmem>>, vector<16x1xi32>
    %cst = arith.constant dense<0xFF800000> : vector<16xf32>
    %2 = vector.multi_reduction <maximumf>, %0, %cst [1] : vector<16x32xf32> to vector<16xf32>
    %3 = vector.shape_cast %2 : vector<16xf32> to vector<16x1xf32>
    %4 = vector.broadcast %3 : vector<16x1xf32> to vector<16x32xf32>
    %5 = arith.subf %0, %4 : vector<16x32xf32>
    %6 = math.exp %5 : vector<16x32xf32>
    %cst_3 = arith.constant dense<0.000000e+00> : vector<16xf32>
    %7 = vector.multi_reduction <add>, %6, %cst_3 [1] : vector<16x32xf32> to vector<16xf32>
    %8 = vector.shape_cast %7 : vector<16xf32> to vector<16x1xf32>
    %9 = math.log %8 : vector<16x1xf32>
    %10 = arith.addf %3, %9 : vector<16x1xf32>
    %11 = tpu.iota {dimensions = array<i32: 1>} : vector<16x32xi32>
    %12 = vector.broadcast %1 : vector<16x1xi32> to vector<16x32xi32>
    %13 = arith.cmpi eq, %11, %12 : vector<16x32xi32>
    %cst_4 = arith.constant 0.000000e+00 : f32
    %14 = vector.broadcast %cst_4 : f32 to vector<16x32xf32>
    %15 = arith.select %13, %0, %14 : vector<16x32xi1>, vector<16x32xf32>
    %cst_5 = arith.constant dense<0.000000e+00> : vector<16xf32>
    %16 = vector.multi_reduction <add>, %15, %cst_5 [1] : vector<16x32xf32> to vector<16xf32>
    %17 = vector.shape_cast %16 : vector<16xf32> to vector<16x1xf32>
    %cst_6 = arith.constant 0.899999976 : f32
    %18 = vector.broadcast %cst_6 : f32 to vector<16x1xf32>
    %19 = arith.mulf %18, %17 : vector<16x1xf32>
    %20 = arith.subf %10, %19 : vector<16x1xf32>
    %cst_7 = arith.constant dense<0.000000e+00> : vector<16xf32>
    %21 = vector.multi_reduction <add>, %0, %cst_7 [1] : vector<16x32xf32> to vector<16xf32>
    %22 = vector.shape_cast %21 : vector<16xf32> to vector<16x1xf32>
    %cst_8 = arith.constant 3.125000e-03 : f32
    %23 = vector.broadcast %cst_8 : f32 to vector<16x1xf32>
    %24 = arith.mulf %23, %22 : vector<16x1xf32>
    %25 = arith.subf %20, %24 : vector<16x1xf32>
    %c0_9 = arith.constant 0 : index
    %c0_10 = arith.constant 0 : index
    %26 = vector.load %arg3[%c0_9, %c0_10] : memref<16x1xf32, #tpu.memory_space<vmem>>, vector<16x1xf32>
    tpu.vector_store %arg3[%c0_9, %c0_10], %25 {strides = array<i32>} : memref<16x1xf32, #tpu.memory_space<vmem>>, vector<16x1xf32>,
    return
  }
  func.func @transform_0(%arg0: i32) -> (i32, i32) {
    %c0_i32 = arith.constant 0 : i32
    %c0_i32_0 = arith.constant 0 : i32
    return %arg0, %c0_i32 : i32, i32
  }
  func.func @transform_1(%arg0: i32) -> (i32, i32) {
    %c0_i32 = arith.constant 0 : i32
    %c0_i32_0 = arith.constant 0 : i32
    return %arg0, %c0_i32 : i32, i32
  }
  func.func @transform_2(%arg0: i32) -> (i32, i32) {
    %c0_i32 = arith.constant 0 : i32
    %c0_i32_0 = arith.constant 0 : i32
    return %arg0, %c0_i32 : i32, i32
  }
}

</mosaic_0001>

<llo_original>
// kernel: tpu_custom_call.1
$region0: #{tpu_custom_call.1}
  #allocation0 [shape = 'u32[]', space=smem, size = 0x4, offset = 0x4, fixed_abs, tag = 'smem constant byte address 0x4 - core index']
  #allocation1 [shape = 'u32[144,128]{1,0:T(1,128)}', space=vmem, size = 0x12000, scoped, tag = 'internal scratch']
  %s0 = inlined_call_operand.vmem [shape: f32[16,32], index: 0, kind: input, shape index: {}]
  %s1 = inlined_call_operand.vmem [shape: s32[16,1], index: 1, kind: input, shape index: {}]
  %s2 = inlined_call_operand.vmem [shape: f32[16,1], index: 2, kind: output, shape index: {}]
  %s3 = sld [smem:[#allocation0]]
  $region18: #{tpu_custom_call.1} parent=0
    _
  %s5 = ssub.s32 1, %s3
  %s6 = scalar_select 0, %s5, %s3
  // Predicated region
  $region2: #{tpu_custom_call.1} parent=0 // pred_check
    _
  $region3: #{tpu_custom_call.1} parent=0 // pred_check_branch
    %8 = sbr.rel (0) target = $region5
  $region4: #{tpu_custom_call.1} parent=0 // pred_region
    _
  $region5: #{tpu_custom_call.1} parent=0 // pred_fallthru
    _
  // Predicated region
  $region6: #{tpu_custom_call.1} parent=0 // pred_check
    _
  $region7: #{tpu_custom_call.1} parent=0 // pred_check_branch
    %10 = sbr.rel (0) target = $region9
  $region8: #{tpu_custom_call.1} parent=0 // pred_region
    _
  $region9: #{tpu_custom_call.1} parent=0 // pred_fallthru
    _
  %v11 = vld [vmem:[%s0] sm:$0xff]
  %v12 = vld [vmem:[%s0 + $0x8] sm:$0xff]
  %v13 = vld [vmem:[%s1] sm:$0xff]
  %v14 = vld [vmem:[%s1 + $0x8] sm:$0xff]
  %vm15 = vcmask 261120
  %v16 = vsel %vm15, %v11, -inf
  %17 = vmax.xlane.f32.xlu0 %v16
  %v18 = vpop.xlane.xlu0 %17
  %v19 = vsel %vm15, %v12, -inf
  %20 = vmax.xlane.f32.xlu0 %v19
  %v21 = vpop.xlane.xlu0 %20
  %v22 = vsub.f32 %v11, %v18
  %v23 = vsub.f32 %v12, %v21
  %v24 = vmul.f32 %v22, 1.442695
  %v25 = vpow.pop %v24
  %v26 = vmul.f32 %v23, 1.442695
  %v27 = vpow.pop %v26
  %v28 = vsel %vm15, %v25, 0.0
  %29 = vadd.xlane.f32.xlu0 %v28
  %v30 = vpop.xlane.xlu0 %29
  %v31 = vsel %vm15, %v27, 0.0
  %32 = vadd.xlane.f32.xlu0 %v31
  %v33 = vpop.xlane.xlu0 %32
  %v34 = vlog2.pop %v30
  %v35 = vmul.f32 %v34, 0.6931472
  %v36 = vlog2.pop %v33
  %v37 = vmul.f32 %v36, 0.6931472
  %v38 = vadd.f32 %v18, %v35
  %v39 = vadd.f32 %v21, %v37
  %v40 = vlaneseq
  %v41 = vand.u32 %v40, 127
  %42 = vset.pattern.permute.xlu0 0
  %43 = vperm.xlu0 %42, %v13
  %v44 = vpop.permute.xlu0 %43
  %45 = vset.pattern.permute.xlu0 0
  %46 = vperm.xlu0 %45, %v14
  %v47 = vpop.permute.xlu0 %46
  %vm48 = vcmp.eq.s32.totalorder %v41, %v44
  %vm49 = vcmp.eq.s32.totalorder %v41, %v47
  %v50 = vsel %vm48, %v11, 0.0
  %v51 = vsel %vm49, %v12, 0.0
  %v52 = vsel %vm15, %v50, 0.0
  %53 = vadd.xlane.f32.xlu0 %v52
  %v54 = vpop.xlane.xlu0 %53
  %v55 = vsel %vm15, %v51, 0.0
  %56 = vadd.xlane.f32.xlu0 %v55
  %v57 = vpop.xlane.xlu0 %56
  %v58 = vmul.f32 %v54, 0.9
  %v59 = vmul.f32 %v57, 0.9
  %v60 = vsub.f32 %v38, %v58
  %v61 = vsub.f32 %v39, %v59
  %v62 = vsel %vm15, %v11, 0.0
  %63 = vadd.xlane.f32.xlu0 %v62
  %v64 = vpop.xlane.xlu0 %63
  %v65 = vsel %vm15, %v12, 0.0
  %66 = vadd.xlane.f32.xlu0 %v65
  %v67 = vpop.xlane.xlu0 %66
  %v68 = vmul.f32 %v64, 0.003125
  %v69 = vmul.f32 %v67, 0.003125
  %v70 = vsub.f32 %v60, %v68
  %v71 = vsub.f32 %v61, %v69
  %vm72 = vcmask 7168
  %73 = vst.msk [vmem:[%s2] sm:$0xff] %vm72, %v70
  %74 = vst.msk [vmem:[%s2 + $0x8] sm:$0xff] %vm72, %v71
  // Predicated region
  $region10: #{tpu_custom_call.1} parent=0 // pred_check
    _
  $region11: #{tpu_custom_call.1} parent=0 // pred_check_branch
    %76 = sbr.rel (0) target = $region13
  $region12: #{tpu_custom_call.1} parent=0 // pred_region
    _
  $region13: #{tpu_custom_call.1} parent=0 // pred_fallthru
    _
  // Predicated region
  $region14: #{tpu_custom_call.1} parent=0 // pred_check
    _
  $region15: #{tpu_custom_call.1} parent=0 // pred_check_branch
    %78 = sbr.rel (0) target = $region17
  $region16: #{tpu_custom_call.1} parent=0 // pred_region
    _
  $region17: #{tpu_custom_call.1} parent=0 // pred_fallthru
    _

</llo_original>
